<compile_context>
chip_gen: v6e
topology: v6e:2x2x1
jax: 0.10.0
libtpu: 0.0.40
codegen_flags: <defaults>
</compile_context>

<pallas_src>
import functools

import jax
import jax.numpy as jnp
from jax import lax
from jax.experimental import pallas as pl
from jax.experimental.pallas import tpu as pltpu

BBOX_SIZE = 5          # BoundingBox2DIndex.size()
POINT_END = 2          # slice(0, 2)
HEADING_IDX = 2
LANE = 128             # TPU lane width
LABEL_COL = BBOX_SIZE  # output lane carrying the label


def _round_up(x, m):
    return (x + m - 1) // m * m


# --------------------------------------------------------------------------- #
# Kernel
# --------------------------------------------------------------------------- #
def _agent_head_kernel(x_ref, wcat_ref, bcat_ref, w2_ref, b2_ref, out_ref,
                       *, label_hidden_col):
    """One fused forward block.

    x_ref    : (bm, D)   f32 activations
    wcat_ref : (D, fp)   bf16  cols [0,d_ffn)=W1, col d_ffn=wl, rest exact 0
    bcat_ref : (1, fp)   f32   matching bias layout
    w2_ref   : (fp,128)  bf16  cols [0,5)=W2, [d_ffn,5]=1.0 (label route), rest 0
    b2_ref   : (1, 128)  f32   cols [0,5)=b2, rest 0
    out_ref  : (bm, 128) f32   cols 0..4 = states, col 5 = label, rest 0
    """
    # bf16 operands, f32 accumulation (keeps the exact-zero padding columns).
    xb = x_ref[...].astype(jnp.bfloat16)
    y = jnp.dot(xb, wcat_ref[...], preferred_element_type=jnp.float32) + bcat_ref[...]

    # ReLU on hidden features; the label column passes through untouched.
    hcol = lax.broadcasted_iota(jnp.int32, (1, y.shape[1]), 1)
    h = jnp.where(hcol == label_hidden_col, y, jnp.maximum(y, 0.0))

    # Second layer writes straight into the lane-dense output layout.
    s = jnp.dot(h.astype(jnp.bfloat16), w2_ref[...],
                preferred_element_type=jnp.float32) + b2_ref[...]

    # Column transform: cols 0,1 -> tanh*32 ; col 2 -> tanh*pi ; others untouched.
    ocol = lax.broadcasted_iota(jnp.int32, (1, LANE), 1)
    scale = jnp.where(ocol == HEADING_IDX, jnp.float32(jnp.pi), jnp.float32(32.0))
    t = jnp.tanh(s)
    out_ref[...] = jnp.where(ocol <= HEADING_IDX, t * scale, s)


# --------------------------------------------------------------------------- #
# Parameter packing / tiling
# --------------------------------------------------------------------------- #
def _pack_params(params, d_model, d_ffn):
    """Fold all four linears into two lane-dense weight/bias pairs (bf16 weights)."""
    w1, b1 = params["w1"], params["b1"]          # (D, F), (1, F)
    w2, b2 = params["w2"], params["b2"]          # (F, 5), (1, 5)
    wl, bl = params["wl"], params["bl"]          # (D, 1), (1, 1)

    fp = _round_up(d_ffn + 1, LANE)              # hidden width + 1 label lane, padded
    label_col = d_ffn                            # label rides in the first padding lane

    w_cat = jnp.zeros((d_model, fp), jnp.float32)
    w_cat = w_cat.at[:, :d_ffn].set(w1)
    w_cat = w_cat.at[:, label_col].set(wl[:, 0])

    b_cat = jnp.zeros((1, fp), jnp.float32)
    b_cat = b_cat.at[:, :d_ffn].set(b1.reshape(1, d_ffn))
    b_cat = b_cat.at[0, label_col].set(bl[0, 0])

    w2p = jnp.zeros((fp, LANE), jnp.float32)
    w2p = w2p.at[:d_ffn, :BBOX_SIZE].set(w2)
    w2p = w2p.at[label_col, LABEL_COL].set(1.0)  # route label -> output lane 5

    b2p = jnp.zeros((1, LANE), jnp.float32).at[0, :BBOX_SIZE].set(b2.reshape(BBOX_SIZE))

    return (w_cat.astype(jnp.bfloat16), b_cat,
            w2p.astype(jnp.bfloat16), b2p, fp, label_col)


def _choose_m_tiling(m, d, fp):
    """VMEM-aware row tiling -> (block_m, n_blocks, vmem_limit_bytes)."""
    try:
        vmem_cap = int(pltpu.get_tpu_info().vmem_capacity_bytes)
    except Exception:
        vmem_cap = 64 * 1024 * 1024  # conservative default (v7x per-TC)

    # Resident, single-buffered bf16 weights + f32 bias rows (8-sublane padded).
    fixed = d * fp * 2 + fp * LANE * 2 + 8 * fp * 4 + 8 * LANE * 4
    # Per-row cost: double-buffered f32 x / out tiles + in-kernel intermediates
    # (bf16 x, f32 y, bf16 h, f32 s / tanh temporaries).
    per_row = 2 * d * 4 + 2 * LANE * 4 + d * 2 + fp * 4 + fp * 2 + 4 * LANE * 4

    budget = int(vmem_cap * 0.6)
    bm_cap = (budget - fixed) // per_row if budget > fixed else 8
    bm_cap = max(8, min(512, (bm_cap // 8) * 8))

    m8 = _round_up(max(m, 1), 8)
    if m8 <= bm_cap:
        block_m = m8
    else:
        # Fewest blocks that fit, sized to minimize dead rows; also guarantees
        # >=2 "parallel" grid steps so v7x's two TensorCores both get work.
        n_blocks = pl.cdiv(m8, bm_cap)
        block_m = _round_up(pl.cdiv(m8, n_blocks), 8)
    n_m = pl.cdiv(m, block_m)

    est = fixed + block_m * per_row
    vmem_limit = int(min(vmem_cap * 0.9, max(32 * 1024 * 1024, 2 * est)))
    return block_m, n_m, vmem_limit


# --------------------------------------------------------------------------- #
# pallas_call wrapper
# --------------------------------------------------------------------------- #
def _pallas_forward(x2d, w_cat, b_cat, w2p, b2p, *, label_hidden_col,
                    block_m, n_m, vmem_limit):
    M, D = x2d.shape
    fp = w_cat.shape[1]
    kernel = functools.partial(_agent_head_kernel, label_hidden_col=label_hidden_col)

    def build(weight_pipeline_mode):
        wkw = ({} if weight_pipeline_mode is None
               else {"pipeline_mode": weight_pipeline_mode})
        return pl.pallas_call(
            kernel,
            out_shape=jax.ShapeDtypeStruct((M, LANE), jnp.float32),
            grid=(n_m,),
            in_specs=[
                pl.BlockSpec((block_m, D), lambda i: (i, 0)),        # x: tiled over M
                pl.BlockSpec((D, fp), lambda i: (0, 0), **wkw),      # W1||wl (resident)
                pl.BlockSpec((1, fp), lambda i: (0, 0), **wkw),      # b1||bl
                pl.BlockSpec((fp, LANE), lambda i: (0, 0), **wkw),   # W2 + label route
                pl.BlockSpec((1, LANE), lambda i: (0, 0), **wkw),    # b2
            ],
            out_specs=pl.BlockSpec((block_m, LANE), lambda i: (i, 0)),
            compiler_params=pltpu.CompilerParams(
                dimension_semantics=("parallel",),                   # shard M over TCs
                vmem_limit_bytes=vmem_limit),
        )

    try:
        # Grid-invariant weights: single VMEM buffer (halves resident footprint).
        return build(pl.Buffered(1))(x2d, w_cat, b_cat, w2p, b2p)
    except Exception:
        # Fallback: default double-buffering if Buffered(1) is not supported here.
        return build(None)(x2d, w_cat, b_cat, w2p, b2p)


def agent_head_forward(agent_queries, params):
    """agent_queries: (B, A, D) f32 -> {'agent_states': (B,A,5), 'agent_labels': (B,A)}."""
    B, A, D = agent_queries.shape
    M = B * A
    d_ffn = params["w1"].shape[1]

    w_cat, b_cat, w2p, b2p, fp, label_col = _pack_params(params, D, d_ffn)
    block_m, n_m, vmem_limit = _choose_m_tiling(M, D, fp)

    # No wrapper-side padding: Pallas masks the ragged tail block itself (rows >= M
    # read unspecified data and their writes are dropped), so no extra HBM pass.
    x2d = agent_queries.reshape(M, D).astype(jnp.float32)

    slab = _pallas_forward(x2d, w_cat, b_cat, w2p, b2p,
                           label_hidden_col=label_col,
                           block_m=block_m, n_m=n_m, vmem_limit=vmem_limit)

    # NOTE: for very large M this slab re-slice is an extra HBM round-trip; fuse
    # downstream consumers on the slab (or switch to an (M, 8) masked-store output)
    # if the kernel ever becomes output-bandwidth bound.
    agent_states = slab[:, :BBOX_SIZE].reshape(B, A, BBOX_SIZE)
    agent_labels = slab[:, LABEL_COL].reshape(B, A)          # squeeze(dim=-1)
    return {"agent_states": agent_states, "agent_labels": agent_labels}


# --------------------------------------------------------------------------- #
# Synthetic params + pure-JAX reference + test
# --------------------------------------------------------------------------- #
def init_params(key, d_model, d_ffn):
    """Deterministic synthetic parameter init (nn.Linear shapes, stored transposed)."""
    ks = jax.random.split(key, 6)
    scale1 = 1.0 / jnp.sqrt(d_model)
    scale2 = 1.0 / jnp.sqrt(d_ffn)
    return {
        "w1": jax.random.uniform(ks[0], (d_model, d_ffn), jnp.float32, -scale1, scale1),
        "b1": jax.random.uniform(ks[1], (1, d_ffn), jnp.float32, -scale1, scale1),
        "w2": jax.random.uniform(ks[2], (d_ffn, BBOX_SIZE), jnp.float32, -scale2, scale2),
        "b2": jax.random.uniform(ks[3], (1, BBOX_SIZE), jnp.float32, -scale2, scale2),
        "wl": jax.random.uniform(ks[4], (d_model, 1), jnp.float32, -scale1, scale1),
        "bl": jax.random.uniform(ks[5], (1, 1), jnp.float32, -scale1, scale1),
    }


def _reference_forward(agent_queries, params):
    """Pure-JAX f32 reference (matches the PyTorch module)."""
    x = agent_queries
    h = jnp.maximum(x @ params["w1"] + params["b1"][0], 0.0)
    s = h @ params["w2"] + params["b2"][0]
    point = jnp.tanh(s[..., :POINT_END]) * 32.0
    heading = jnp.tanh(s[..., HEADING_IDX:HEADING_IDX + 1]) * jnp.pi
    s = jnp.concatenate([point, heading, s[..., HEADING_IDX + 1:]], axis=-1)
    lab = (x @ params["wl"] + params["bl"][0])[..., 0]
    return {"agent_states": s, "agent_labels": lab}


if __name__ == "__main__":
    key = jax.random.PRNGKey(0)
    k_in, k_par = jax.random.split(key)

    B, num_agents, d_model, d_ffn = 2, 8, 32, 64
    agent_queries = jax.random.normal(k_in, (B, num_agents, d_model), jnp.float32)
    params = init_params(k_par, d_model, d_ffn)

    out = agent_head_forward(agent_queries, params)
    jax.block_until_ready(out)

    ref = _reference_forward(agent_queries, params)
    assert out["agent_states"].shape == (B, num_agents, BBOX_SIZE)
    assert out["agent_labels"].shape == (B, num_agents)
    # bf16 matmul operands / f32 accumulation -> compare against the f32 reference
    # with bf16-appropriate tolerances (states are tanh-scaled by up to 32).
    assert jnp.allclose(out["agent_states"], ref["agent_states"], atol=0.5, rtol=0.05)
    assert jnp.allclose(out["agent_labels"], ref["agent_labels"], atol=0.03, rtol=0.05)

    print("KERNEL_OK")
</pallas_src>

<mosaic_0001>
module attributes {stable_mosaic.version = 11 : i64} {
  func.func @_agent_head_kernel(%arg0: i32, %arg1: memref<16x32xf32, #tpu.memory_space<vmem>>, %arg2: memref<32x128xbf16, #tpu.memory_space<vmem>>, %arg3: memref<1x128xf32, #tpu.memory_space<vmem>>, %arg4: memref<128x128xbf16, #tpu.memory_space<vmem>>, %arg5: memref<1x128xf32, #tpu.memory_space<vmem>>, %arg6: memref<16x128xf32, #tpu.memory_space<vmem>>) attributes {dimension_semantics = [#tpu.dimension_semantics<parallel>], iteration_bounds = array<i64: 1>, scalar_prefetch = 0 : i64, scratch_operands = 0 : i64, tpu.core_type = #tpu.core_type<tc>, window_params = [{transform_indices = @transform_0, window_bounds = array<i64: 16, 32>}, {pipeline_mode = #tpu.pipeline_mode<synchronous>, transform_indices = @transform_1, window_bounds = array<i64: 32, 128>}, {pipeline_mode = #tpu.pipeline_mode<synchronous>, transform_indices = @transform_2, window_bounds = array<i64: 1, 128>}, {pipeline_mode = #tpu.pipeline_mode<synchronous>, transform_indices = @transform_3, window_bounds = array<i64: 128, 128>}, {pipeline_mode = #tpu.pipeline_mode<synchronous>, transform_indices = @transform_4, window_bounds = array<i64: 1, 128>}, {transform_indices = @transform_5, window_bounds = array<i64: 16, 128>}]} {
    %c0 = arith.constant 0 : index
    %c0_0 = arith.constant 0 : index
    %0 = vector.load %arg1[%c0, %c0_0] : memref<16x32xf32, #tpu.memory_space<vmem>>, vector<16x32xf32>
    %1 = arith.truncf %0 : vector<16x32xf32> to vector<16x32xbf16>
    %c0_1 = arith.constant 0 : index
    %c0_2 = arith.constant 0 : index
    %2 = vector.load %arg2[%c0_1, %c0_2] : memref<32x128xbf16, #tpu.memory_space<vmem>>, vector<32x128xbf16>
    %cst = arith.constant dense<0.000000e+00> : vector<16x128xf32>
    %3 = tpu.matmul %1, %2, %cst {dimension_numbers = #tpu.dot_dimension_numbers<[1], [0], [0], [1], [0, 0, 1, 1], [], []>} : vector<16x32xbf16>, vector<32x128xbf16>, vector<16x128xf32> -> vector<16x128xf32>
    %c0_3 = arith.constant 0 : index
    %c0_4 = arith.constant 0 : index
    %4 = vector.load %arg3[%c0_3, %c0_4] : memref<1x128xf32, #tpu.memory_space<vmem>>, vector<1x128xf32>
    %5 = vector.broadcast %4 : vector<1x128xf32> to vector<16x128xf32>
    %6 = arith.addf %3, %5 : vector<16x128xf32>
    %7 = tpu.iota {dimensions = array<i32: 1>} : vector<1x128xi32>
    %c64_i32 = arith.constant 64 : i32
    %8 = vector.broadcast %c64_i32 : i32 to vector<1x128xi32>
    %9 = arith.cmpi eq, %7, %8 : vector<1x128xi32>
    %cst_5 = arith.constant 0.000000e+00 : f32
    %10 = vector.broadcast %cst_5 : f32 to vector<16x128xf32>
    %11 = arith.maximumf %6, %10 : vector<16x128xf32>
    %12 = vector.shape_cast %9 : vector<1x128xi1> to vector<1x128xi1>
    %13 = vector.broadcast %12 : vector<1x128xi1> to vector<16x128xi1>
    %14 = arith.select %13, %6, %11 : vector<16x128xi1>, vector<16x128xf32>
    %15 = arith.truncf %14 : vector<16x128xf32> to vector<16x128xbf16>
    %c0_6 = arith.constant 0 : index
    %c0_7 = arith.constant 0 : index
    %16 = vector.load %arg4[%c0_6, %c0_7] : memref<128x128xbf16, #tpu.memory_space<vmem>>, vector<128x128xbf16>
    %cst_8 = arith.constant dense<0.000000e+00> : vector<16x128xf32>
    %17 = tpu.matmul %15, %16, %cst_8 {dimension_numbers = #tpu.dot_dimension_numbers<[1], [0], [0], [1], [0, 0, 1, 1], [], []>} : vector<16x128xbf16>, vector<128x128xbf16>, vector<16x128xf32> -> vector<16x128xf32>
    %c0_9 = arith.constant 0 : index
    %c0_10 = arith.constant 0 : index
    %18 = vector.load %arg5[%c0_9, %c0_10] : memref<1x128xf32, #tpu.memory_space<vmem>>, vector<1x128xf32>
    %19 = vector.broadcast %18 : vector<1x128xf32> to vector<16x128xf32>
    %20 = arith.addf %17, %19 : vector<16x128xf32>
    %21 = tpu.iota {dimensions = array<i32: 1>} : vector<1x128xi32>
    %c2_i32 = arith.constant 2 : i32
    %22 = vector.broadcast %c2_i32 : i32 to vector<1x128xi32>
    %23 = arith.cmpi eq, %21, %22 : vector<1x128xi32>
    %cst_11 = arith.constant 3.14159274 : f32
    %cst_12 = arith.constant 3.200000e+01 : f32
    %24 = vector.broadcast %cst_11 : f32 to vector<1x128xf32>
    %25 = vector.broadcast %cst_12 : f32 to vector<1x128xf32>
    %26 = arith.select %23, %24, %25 : vector<1x128xi1>, vector<1x128xf32>
    %27 = math.tanh %20 : vector<16x128xf32>
    %c2_i32_13 = arith.constant 2 : i32
    %28 = vector.broadcast %c2_i32_13 : i32 to vector<1x128xi32>
    %29 = arith.cmpi sle, %21, %28 : vector<1x128xi32>
    %30 = vector.broadcast %26 : vector<1x128xf32> to vector<16x128xf32>
    %31 = arith.mulf %27, %30 : vector<16x128xf32>
    %32 = vector.shape_cast %29 : vector<1x128xi1> to vector<1x128xi1>
    %33 = vector.broadcast %32 : vector<1x128xi1> to vector<16x128xi1>
    %34 = arith.select %33, %31, %20 : vector<16x128xi1>, vector<16x128xf32>
    %c0_14 = arith.constant 0 : index
    %c0_15 = arith.constant 0 : index
    %35 = vector.load %arg6[%c0_14, %c0_15] : memref<16x128xf32, #tpu.memory_space<vmem>>, vector<16x128xf32>
    tpu.vector_store %arg6[%c0_14, %c0_15], %34 {strides = array<i32>} : memref<16x128xf32, #tpu.memory_space<vmem>>, vector<16x128xf32>,
    return
  }
  func.func @transform_0(%arg0: i32) -> (i32, i32) {
    %c0_i32 = arith.constant 0 : i32
    %c0_i32_0 = arith.constant 0 : i32
    return %arg0, %c0_i32 : i32, i32
  }
  func.func @transform_1(%arg0: i32) -> (i32, i32) {
    %c0_i32 = arith.constant 0 : i32
    %c0_i32_0 = arith.constant 0 : i32
    %c0_i32_1 = arith.constant 0 : i32
    return %c0_i32, %c0_i32_0 : i32, i32
  }
  func.func @transform_2(%arg0: i32) -> (i32, i32) {
    %c0_i32 = arith.constant 0 : i32
    %c0_i32_0 = arith.constant 0 : i32
    %c0_i32_1 = arith.constant 0 : i32
    return %c0_i32, %c0_i32_0 : i32, i32
  }
  func.func @transform_3(%arg0: i32) -> (i32, i32) {
    %c0_i32 = arith.constant 0 : i32
    %c0_i32_0 = arith.constant 0 : i32
    %c0_i32_1 = arith.constant 0 : i32
    return %c0_i32, %c0_i32_0 : i32, i32
  }
  func.func @transform_4(%arg0: i32) -> (i32, i32) {
    %c0_i32 = arith.constant 0 : i32
    %c0_i32_0 = arith.constant 0 : i32
    %c0_i32_1 = arith.constant 0 : i32
    return %c0_i32, %c0_i32_0 : i32, i32
  }
  func.func @transform_5(%arg0: i32) -> (i32, i32) {
    %c0_i32 = arith.constant 0 : i32
    %c0_i32_0 = arith.constant 0 : i32
    return %arg0, %c0_i32 : i32, i32
  }
}

module attributes {stable_mosaic.version = 11 : i64} {
  func.func @_agent_head_kernel(%arg0: i32, %arg1: memref<16x32xf32, #tpu.memory_space<vmem>>, %arg2: memref<32x128xbf16, #tpu.memory_space<vmem>>, %arg3: memref<1x128xf32, #tpu.memory_space<vmem>>, %arg4: memref<128x128xbf16, #tpu.memory_space<vmem>>, %arg5: memref<1x128xf32, #tpu.memory_space<vmem>>, %arg6: memref<16x128xf32, #tpu.memory_space<vmem>>) attributes {dimension_semantics = [#tpu.dimension_semantics<parallel>], iteration_bounds = array<i64: 1>, scalar_prefetch = 0 : i64, scratch_operands = 0 : i64, tpu.core_type = #tpu.core_type<tc>, window_params = [{transform_indices = @transform_0, window_bounds = array<i64: 16, 32>}, {pipeline_mode = #tpu.pipeline_mode<synchronous>, transform_indices = @transform_1, window_bounds = array<i64: 32, 128>}, {pipeline_mode = #tpu.pipeline_mode<synchronous>, transform_indices = @transform_2, window_bounds = array<i64: 1, 128>}, {pipeline_mode = #tpu.pipeline_mode<synchronous>, transform_indices = @transform_3, window_bounds = array<i64: 128, 128>}, {pipeline_mode = #tpu.pipeline_mode<synchronous>, transform_indices = @transform_4, window_bounds = array<i64: 1, 128>}, {transform_indices = @transform_5, window_bounds = array<i64: 16, 128>}]} {
    %c0 = arith.constant 0 : index
    %c0_0 = arith.constant 0 : index
    %0 = vector.load %arg1[%c0, %c0_0] : memref<16x32xf32, #tpu.memory_space<vmem>>, vector<16x32xf32>
    %1 = arith.truncf %0 : vector<16x32xf32> to vector<16x32xbf16>
    %c0_1 = arith.constant 0 : index
    %c0_2 = arith.constant 0 : index
    %2 = vector.load %arg2[%c0_1, %c0_2] : memref<32x128xbf16, #tpu.memory_space<vmem>>, vector<32x128xbf16>
    %cst = arith.constant dense<0.000000e+00> : vector<16x128xf32>
    %3 = tpu.matmul %1, %2, %cst {dimension_numbers = #tpu.dot_dimension_numbers<[1], [0], [0], [1], [0, 0, 1, 1], [], []>} : vector<16x32xbf16>, vector<32x128xbf16>, vector<16x128xf32> -> vector<16x128xf32>
    %c0_3 = arith.constant 0 : index
    %c0_4 = arith.constant 0 : index
    %4 = vector.load %arg3[%c0_3, %c0_4] : memref<1x128xf32, #tpu.memory_space<vmem>>, vector<1x128xf32>
    %5 = vector.broadcast %4 : vector<1x128xf32> to vector<16x128xf32>
    %6 = arith.addf %3, %5 : vector<16x128xf32>
    %7 = tpu.iota {dimensions = array<i32: 1>} : vector<1x128xi32>
    %c64_i32 = arith.constant 64 : i32
    %8 = vector.broadcast %c64_i32 : i32 to vector<1x128xi32>
    %9 = arith.cmpi eq, %7, %8 : vector<1x128xi32>
    %cst_5 = arith.constant 0.000000e+00 : f32
    %10 = vector.broadcast %cst_5 : f32 to vector<16x128xf32>
    %11 = arith.maximumf %6, %10 : vector<16x128xf32>
    %12 = vector.shape_cast %9 : vector<1x128xi1> to vector<1x128xi1>
    %13 = vector.broadcast %12 : vector<1x128xi1> to vector<16x128xi1>
    %14 = arith.select %13, %6, %11 : vector<16x128xi1>, vector<16x128xf32>
    %15 = arith.truncf %14 : vector<16x128xf32> to vector<16x128xbf16>
    %c0_6 = arith.constant 0 : index
    %c0_7 = arith.constant 0 : index
    %16 = vector.load %arg4[%c0_6, %c0_7] : memref<128x128xbf16, #tpu.memory_space<vmem>>, vector<128x128xbf16>
    %cst_8 = arith.constant dense<0.000000e+00> : vector<16x128xf32>
    %17 = tpu.matmul %15, %16, %cst_8 {dimension_numbers = #tpu.dot_dimension_numbers<[1], [0], [0], [1], [0, 0, 1, 1], [], []>} : vector<16x128xbf16>, vector<128x128xbf16>, vector<16x128xf32> -> vector<16x128xf32>
    %c0_9 = arith.constant 0 : index
    %c0_10 = arith.constant 0 : index
    %18 = vector.load %arg5[%c0_9, %c0_10] : memref<1x128xf32, #tpu.memory_space<vmem>>, vector<1x128xf32>
    %19 = vector.broadcast %18 : vector<1x128xf32> to vector<16x128xf32>
    %20 = arith.addf %17, %19 : vector<16x128xf32>
    %21 = tpu.iota {dimensions = array<i32: 1>} : vector<1x128xi32>
    %c2_i32 = arith.constant 2 : i32
    %22 = vector.broadcast %c2_i32 : i32 to vector<1x128xi32>
    %23 = arith.cmpi eq, %21, %22 : vector<1x128xi32>
    %cst_11 = arith.constant 3.14159274 : f32
    %cst_12 = arith.constant 3.200000e+01 : f32
    %24 = vector.broadcast %cst_11 : f32 to vector<1x128xf32>
    %25 = vector.broadcast %cst_12 : f32 to vector<1x128xf32>
    %26 = arith.select %23, %24, %25 : vector<1x128xi1>, vector<1x128xf32>
    %27 = math.tanh %20 : vector<16x128xf32>
    %c2_i32_13 = arith.constant 2 : i32
    %28 = vector.broadcast %c2_i32_13 : i32 to vector<1x128xi32>
    %29 = arith.cmpi sle, %21, %28 : vector<1x128xi32>
    %30 = vector.broadcast %26 : vector<1x128xf32> to vector<16x128xf32>
    %31 = arith.mulf %27, %30 : vector<16x128xf32>
    %32 = vector.shape_cast %29 : vector<1x128xi1> to vector<1x128xi1>
    %33 = vector.broadcast %32 : vector<1x128xi1> to vector<16x128xi1>
    %34 = arith.select %33, %31, %20 : vector<16x128xi1>, vector<16x128xf32>
    %c0_14 = arith.constant 0 : index
    %c0_15 = arith.constant 0 : index
    %35 = vector.load %arg6[%c0_14, %c0_15] : memref<16x128xf32, #tpu.memory_space<vmem>>, vector<16x128xf32>
    tpu.vector_store %arg6[%c0_14, %c0_15], %34 {strides = array<i32>} : memref<16x128xf32, #tpu.memory_space<vmem>>, vector<16x128xf32>,
    return
  }
  func.func @transform_0(%arg0: i32) -> (i32, i32) {
    %c0_i32 = arith.constant 0 : i32
    %c0_i32_0 = arith.constant 0 : i32
    return %arg0, %c0_i32 : i32, i32
  }
  func.func @transform_1(%arg0: i32) -> (i32, i32) {
    %c0_i32 = arith.constant 0 : i32
    %c0_i32_0 = arith.constant 0 : i32
    %c0_i32_1 = arith.constant 0 : i32
    return %c0_i32, %c0_i32_0 : i32, i32
  }
  func.func @transform_2(%arg0: i32) -> (i32, i32) {
    %c0_i32 = arith.constant 0 : i32
    %c0_i32_0 = arith.constant 0 : i32
    %c0_i32_1 = arith.constant 0 : i32
    return %c0_i32, %c0_i32_0 : i32, i32
  }
  func.func @transform_3(%arg0: i32) -> (i32, i32) {
    %c0_i32 = arith.constant 0 : i32
    %c0_i32_0 = arith.constant 0 : i32
    %c0_i32_1 = arith.constant 0 : i32
    return %c0_i32, %c0_i32_0 : i32, i32
  }
  func.func @transform_4(%arg0: i32) -> (i32, i32) {
    %c0_i32 = arith.constant 0 : i32
    %c0_i32_0 = arith.constant 0 : i32
    %c0_i32_1 = arith.constant 0 : i32
    return %c0_i32, %c0_i32_0 : i32, i32
  }
  func.func @transform_5(%arg0: i32) -> (i32, i32) {
    %c0_i32 = arith.constant 0 : i32
    %c0_i32_0 = arith.constant 0 : i32
    return %arg0, %c0_i32 : i32, i32
  }
}

</mosaic_0001>

<llo_original>
// kernel: tpu_custom_call.1
$region0: #{tpu_custom_call.1}
  #allocation0 [shape = 'u32[]', space=smem, size = 0x4, offset = 0x4, fixed_abs, tag = 'smem constant byte address 0x4 - core index']
  #allocation1 [shape = 'u32[144,128]{1,0:T(1,128)}', space=vmem, size = 0x12000, scoped, tag = 'internal scratch']
  %s0 = inlined_call_operand.hbm [shape: f32[16,32], index: 0, kind: input, shape index: {}]
  %s1 = inlined_call_operand.hbm [shape: bf16[32,128], index: 1, kind: input, shape index: {}]
  %s2 = inlined_call_operand.vmem [shape: f32[1,128], index: 2, kind: input, shape index: {}]
  %s3 = inlined_call_operand.hbm [shape: bf16[128,128], index: 3, kind: input, shape index: {}]
  %s4 = inlined_call_operand.vmem [shape: f32[1,128], index: 4, kind: input, shape index: {}]
  %s5 = inlined_call_operand.hbm [shape: f32[16,128], index: 5, kind: output, shape index: {}]
  %s6 = sld [smem:[#allocation0]]
  $region42: #{tpu_custom_call.1} parent=0
    _
  %s8 = ssub.s32 1, %s6
  %s9 = scalar_select 0, %s8, %s6
  $region1: #{tpu_custom_call.1} parent=0
    #allocation2 [shape = 'u8[8192]{0}', space=vmem, size = 0x2000, scoped, tag = 'input window, operand 0, single buffered']
    #allocation3 [shape = 's32[1]{0}', space=sflag, size = 0x4, scoped, tag = 'scoped memory for tpu_custom_call.1']
    #allocation4 [shape = 's32[1]{0}', space=sflag, size = 0x4, scoped, tag = 'scoped memory for tpu_custom_call.1']
    #allocation5 [shape = 'u8[8192]{0}', space=vmem, size = 0x2000, scoped, tag = 'input window, operand 1, single buffered']
    #allocation6 [shape = 's32[1]{0}', space=sflag, size = 0x4, scoped, tag = 'scoped memory for tpu_custom_call.1']
    #allocation7 [shape = 'u8[32768]{0}', space=vmem, size = 0x8000, scoped, tag = 'input window, operand 3, single buffered']
    #allocation8 [shape = 'u8[8192]{0}', space=vmem, size = 0x2000, scoped, tag = 'output window, operand 0, single buffered']
    %10 = vsyncpa [#allocation3], 0
    %11 = vsyncpa [#allocation6], 0
    %12 = vsyncpa [#allocation4], 0
    // Predicated region
    $region2: #{tpu_custom_call.1} parent=1 // pred_check
      _
    $region3: #{tpu_custom_call.1} parent=1 // pred_check_branch
      %14 = sbr.rel (0) target = $region5
    $region4: #{tpu_custom_call.1} parent=1 // pred_region
      %s16 = ssub.s32 256, 256
      %17 = vsyncadd [#allocation3], %s16
      %s18 = sshll.u32 [#allocation2], 4
      %s19 = int_to_ptr.vmem [resolvable:$true] %s18
      %24 = dma.hbm_to_vmem [thread:$0]  %s0, 256, %s19, [#allocation3], 128, 128, 8
    $region5: #{tpu_custom_call.1} parent=1 // pred_fallthru
      _
    // Predicated region
    $region6: #{tpu_custom_call.1} parent=1 // pred_check
      _
    $region7: #{tpu_custom_call.1} parent=1 // pred_check_branch
      %26 = sbr.rel (0) target = $region9
    $region8: #{tpu_custom_call.1} parent=1 // pred_region
      %s28 = ssub.s32 256, 256
      %29 = vsyncadd [#allocation6], %s28
      %s30 = sshll.u32 [#allocation5], 4
      %s31 = int_to_ptr.vmem [resolvable:$true] %s30
      %36 = dma.hbm_to_vmem [thread:$0]  %s1, 256, %s31, [#allocation6], 64, 64, 4
    $region9: #{tpu_custom_call.1} parent=1 // pred_fallthru
      _
    // Predicated region
    $region10: #{tpu_custom_call.1} parent=1 // pred_check
      _
    $region11: #{tpu_custom_call.1} parent=1 // pred_check_branch
      %38 = sbr.rel (0) target = $region13
    $region12: #{tpu_custom_call.1} parent=1 // pred_region
      _
    $region13: #{tpu_custom_call.1} parent=1 // pred_fallthru
      _
    // Predicated region
    $region14: #{tpu_custom_call.1} parent=1 // pred_check
      _
    $region15: #{tpu_custom_call.1} parent=1 // pred_check_branch
      %40 = sbr.rel (0) target = $region17
    $region16: #{tpu_custom_call.1} parent=1 // pred_region
      %s42 = ssub.s32 1024, 1024
      %43 = vsyncadd [#allocation6], %s42
      %s44 = sshll.u32 [#allocation7], 4
      %s45 = int_to_ptr.vmem [resolvable:$true] %s44
      %50 = dma.hbm_to_vmem [thread:$0]  %s3, 1024, %s45, [#allocation6], 64, 64, 4
    $region17: #{tpu_custom_call.1} parent=1 // pred_fallthru
      _
    // Predicated region
    $region18: #{tpu_custom_call.1} parent=1 // pred_check
      _
    $region19: #{tpu_custom_call.1} parent=1 // pred_check_branch
      %52 = sbr.rel (0) target = $region21
    $region20: #{tpu_custom_call.1} parent=1 // pred_region
      _
    $region21: #{tpu_custom_call.1} parent=1 // pred_fallthru
      _
    // Predicated region
    $region22: #{tpu_custom_call.1} parent=1 // pred_check
      _
    $region23: #{tpu_custom_call.1} parent=1 // pred_check_branch
      %54 = sbr.rel (0) target = $region25
    $region24: #{tpu_custom_call.1} parent=1 // pred_region
      %55 = dma.done [#allocation3], 256
    $region25: #{tpu_custom_call.1} parent=1 // pred_fallthru
      _
    // Predicated region
    $region26: #{tpu_custom_call.1} parent=1 // pred_check
      _
    $region27: #{tpu_custom_call.1} parent=1 // pred_check_branch
      %57 = sbr.rel (0) target = $region29
    $region28: #{tpu_custom_call.1} parent=1 // pred_region
      %58 = dma.done [#allocation6], 256
    $region29: #{tpu_custom_call.1} parent=1 // pred_fallthru
      _
    // Predicated region
    $region30: #{tpu_custom_call.1} parent=1 // pred_check
      _
    $region31: #{tpu_custom_call.1} parent=1 // pred_check_branch
      %60 = sbr.rel (0) target = $region33
    $region32: #{tpu_custom_call.1} parent=1 // pred_region
      %61 = dma.done [#allocation6], 1024
    $region33: #{tpu_custom_call.1} parent=1 // pred_fallthru
      _
    %v63 = vld [vmem:[#allocation2] sm:$0xff]
    %v64 = vld [vmem:[#allocation2 + $0x8] sm:$0xff]
    %v65 = vpack.c.bf16 %v64, %v63
    %v66 = vld [vmem:[#allocation5] sm:$0xf]
    %v67 = vld [vmem:[#allocation5 + $0x4] sm:$0xf]
    %v68 = vld [vmem:[#allocation5 + $0x8] sm:$0xf]
    %v69 = vld [vmem:[#allocation5 + $0xc] sm:$0xf]
    %v70 = vld [vmem:[%s2] sm:$0x1]
    %v72 = vlaneseq
    %v73 = vshrl.u32 %v72, 7
    %v74 = vsub.s32 0, %v73
    %v75 = vrot.slane %v70, %v74
    %v81 = vunpack.c.l.b16 %v66
    %v82 = vunpack.c.l.b16 %v67
    %v83 = vunpack.c.l.b16 %v68
    %v84 = vunpack.c.l.b16 %v69
    %v85 = vpack.c.b16 %v82, %v81
    %v86 = vpack.c.b16 %v84, %v83
    %vm89 = vcmask 261120
    %v91 = vsel %vm89, %v65, 0
    %93 = vmatprep.subr.bf16.mxu0 0
    %94 = vmatpush1.bf16.msra.mxu0 0
    %95 = vmatprep.subr.bf16.mxu0 0
    %96 = vmatpush1.bf16.msra.mxu0 0
    %97 = vmatprep.subr.bf16.mxu0 0
    %98 = vmatpush1.bf16.msra.mxu0 0
    %99 = vmatprep.subr.bf16.mxu0 0
    %100 = vmatpush1.bf16.msra.mxu0 0
    %101 = vmatprep.subr.bf16.mxu0 0
    %102 = vmatpush1.bf16.msra.mxu0 0
    %103 = vmatprep.subr.bf16.mxu0 0
    %104 = vmatpush1.bf16.msra.mxu0 0
    %105 = vmatprep.subr.bf16.mxu0 0
    %106 = vmatpush1.bf16.msra.mxu0 %v86
    %107 = vmatprep.subr.bf16.mxu0 0
    %108 = vmatpush1.bf16.msra.mxu0 %v85
    %109 = vmatprep.subr.bf16.mxu0 0
    %110 = vmatpush2.bf16.msra.mxu0 0
    %111 = vmatprep.subr.bf16.mxu0 0
    %112 = vmatpush2.bf16.msra.mxu0 0
    %113 = vmatprep.subr.bf16.mxu0 0
    %114 = vmatpush2.bf16.msra.mxu0 0
    %115 = vmatprep.subr.bf16.mxu0 0
    %116 = vmatpush2.bf16.msra.mxu0 0
    %117 = vmatprep.subr.bf16.mxu0 0
    %118 = vmatpush2.bf16.msra.mxu0 0
    %119 = vmatprep.subr.bf16.mxu0 0
    %120 = vmatpush2.bf16.msra.mxu0 0
    %121 = vmatprep.subr.bf16.mxu0 0
    %122 = vmatpush2.bf16.msra.mxu0 0
    %123 = vmatprep.subr.bf16.mxu0 0
    %124 = vmatpush2.bf16.msra.mxu0 0
    %125 = vmatprep.mubr.bf16.mxu0 0
    %126 = vmatmul.mubr.bf16.gmra.mxu0 %v91
    %v127 = vpop.f32.mrf.mxu0
    %v128 = vadd.f32 %v75, %v127
    %v129 = vpop.f32.mrf.mxu0
    %v130 = vpop.f32.mrf.mxu0
    %v131 = vadd.f32 %v75, %v130
    %v132 = vpop.f32.mrf.mxu0
    %133 = vdwg.mxu0
    %v134 = vlaneseq
    %v135 = vand.u32 %v134, 127
    %vm136 = vcmp.eq.s32.totalorder %v135, 64
    %v137 = vmax.f32 %v128, 0.0
    %v138 = vmax.f32 %v131, 0.0
    %v139 = vsel %vm136, 1, 0
    %vm140 = vcmp.eq.s32.totalorder %v139, 1
    %v141 = vsel %vm140, %v128, %v137
    %v142 = vsel %vm140, %v131, %v138
    %v143 = vpack.c.bf16 %v142, %v141
    %v144 = vld [vmem:[#allocation7] sm:$0xf]
    %v145 = vld [vmem:[#allocation7 + $0x4] sm:$0xf]
    %v146 = vld [vmem:[#allocation7 + $0x8] sm:$0xf]
    %v147 = vld [vmem:[#allocation7 + $0xc] sm:$0xf]
    %v148 = vld [vmem:[#allocation7 + $0x10] sm:$0xf]
    %v149 = vld [vmem:[#allocation7 + $0x14] sm:$0xf]
    %v150 = vld [vmem:[#allocation7 + $0x18] sm:$0xf]
    %v151 = vld [vmem:[#allocation7 + $0x1c] sm:$0xf]
    %v152 = vld [vmem:[#allocation7 + $0x20] sm:$0xf]
    %v153 = vld [vmem:[#allocation7 + $0x24] sm:$0xf]
    %v154 = vld [vmem:[#allocation7 + $0x28] sm:$0xf]
    %v155 = vld [vmem:[#allocation7 + $0x2c] sm:$0xf]
    %v156 = vld [vmem:[#allocation7 + $0x30] sm:$0xf]
    %v157 = vld [vmem:[#allocation7 + $0x34] sm:$0xf]
    %v158 = vld [vmem:[#allocation7 + $0x38] sm:$0xf]
    %v159 = vld [vmem:[#allocation7 + $0x3c] sm:$0xf]
    %v160 = vld [vmem:[%s4] sm:$0x1]
    %v162 = vlaneseq
    %v163 = vshrl.u32 %v162, 7
    %v164 = vsub.s32 0, %v163
    %v165 = vrot.slane %v160, %v164
    %v183 = vunpack.c.l.b16 %v144
    %v184 = vunpack.c.l.b16 %v145
    %v185 = vunpack.c.l.b16 %v146
    %v186 = vunpack.c.l.b16 %v147
    %v187 = vunpack.c.l.b16 %v148
    %v188 = vunpack.c.l.b16 %v149
    %v189 = vunpack.c.l.b16 %v150
    %v190 = vunpack.c.l.b16 %v151
    %v191 = vunpack.c.l.b16 %v152
    %v192 = vunpack.c.l.b16 %v153
    %v193 = vunpack.c.l.b16 %v154
    %v194 = vunpack.c.l.b16 %v155
    %v195 = vunpack.c.l.b16 %v156
    %v196 = vunpack.c.l.b16 %v157
    %v197 = vunpack.c.l.b16 %v158
    %v198 = vunpack.c.l.b16 %v159
    %v199 = vpack.c.b16 %v184, %v183
    %v200 = vpack.c.b16 %v186, %v185
    %v201 = vpack.c.b16 %v188, %v187
    %v202 = vpack.c.b16 %v190, %v189
    %v203 = vpack.c.b16 %v192, %v191
    %v204 = vpack.c.b16 %v194, %v193
    %v205 = vpack.c.b16 %v196, %v195
    %v206 = vpack.c.b16 %v198, %v197
    %215 = vmatprep.subr.bf16.mxu0 0
    %216 = vmatpush1.bf16.msra.mxu0 %v206
    %217 = vmatprep.subr.bf16.mxu0 0
    %218 = vmatpush1.bf16.msra.mxu0 %v205
    %219 = vmatprep.subr.bf16.mxu0 0
    %220 = vmatpush1.bf16.msra.mxu0 %v204
    %221 = vmatprep.subr.bf16.mxu0 0
    %222 = vmatpush1.bf16.msra.mxu0 %v203
    %223 = vmatprep.subr.bf16.mxu0 0
    %224 = vmatpush1.bf16.msra.mxu0 %v202
    %225 = vmatprep.subr.bf16.mxu0 0
    %226 = vmatpush1.bf16.msra.mxu0 %v201
    %227 = vmatprep.subr.bf16.mxu0 0
    %228 = vmatpush1.bf16.msra.mxu0 %v200
    %229 = vmatprep.subr.bf16.mxu0 0
    %230 = vmatpush1.bf16.msra.mxu0 %v199
    %231 = vmatprep.subr.bf16.mxu0 0
    %232 = vmatpush2.bf16.msra.mxu0 0
    %233 = vmatprep.subr.bf16.mxu0 0
    %234 = vmatpush2.bf16.msra.mxu0 0
    %235 = vmatprep.subr.bf16.mxu0 0
    %236 = vmatpush2.bf16.msra.mxu0 0
    %237 = vmatprep.subr.bf16.mxu0 0
    %238 = vmatpush2.bf16.msra.mxu0 0
    %239 = vmatprep.subr.bf16.mxu0 0
    %240 = vmatpush2.bf16.msra.mxu0 0
    %241 = vmatprep.subr.bf16.mxu0 0
    %242 = vmatpush2.bf16.msra.mxu0 0
    %243 = vmatprep.subr.bf16.mxu0 0
    %244 = vmatpush2.bf16.msra.mxu0 0
    %245 = vmatprep.subr.bf16.mxu0 0
    %246 = vmatpush2.bf16.msra.mxu0 0
    %247 = vmatprep.mubr.bf16.mxu0 0
    %248 = vmatmul.mubr.bf16.gmra.mxu0 %v143
    %v249 = vpop.f32.mrf.mxu0
    %v250 = vadd.f32 %v165, %v249
    %v251 = vpop.f32.mrf.mxu0
    %v252 = vpop.f32.mrf.mxu0
    %v253 = vadd.f32 %v165, %v252
    %v254 = vpop.f32.mrf.mxu0
    %255 = vdwg.mxu0
    %vm256 = vcmp.eq.s32.totalorder %v135, 2
    %v257 = vsel %vm256, 3.1415927, 32.0
    %v258 = vtanh.pop %v250
    %v259 = vtanh.pop %v253
    %vm260 = vcmp.le.s32.totalorder %v135, 2
    %v261 = vmul.f32 %v258, %v257
    %v262 = vmul.f32 %v259, %v257
    %v263 = vsel %vm260, 1, 0
    %vm264 = vcmp.eq.s32.totalorder %v263, 1
    %v265 = vsel %vm264, %v261, %v250
    %v266 = vsel %vm264, %v262, %v253
    %267 = vst [vmem:[#allocation8] sm:$0xff] %v265
    %268 = vst [vmem:[#allocation8 + $0x8] sm:$0xff] %v266
    // Predicated region
    $region34: #{tpu_custom_call.1} parent=1 // pred_check
      _
    $region35: #{tpu_custom_call.1} parent=1 // pred_check_branch
      %270 = sbr.rel (0) target = $region37
    $region36: #{tpu_custom_call.1} parent=1 // pred_region
      %s272 = ssub.s32 256, 256
      %273 = vsyncadd [#allocation4], %s272
      %s274 = sshll.u32 [#allocation8], 4
      %s275 = int_to_ptr.vmem [resolvable:$true] %s274
      %280 = dma.vmem_to_hbm [thread:$0]  %s275, 256, %s5, [#allocation4], 128, 128, 8
    $region37: #{tpu_custom_call.1} parent=1 // pred_fallthru
      _
    // Predicated region
    $region38: #{tpu_custom_call.1} parent=1 // pred_check
      _
    $region39: #{tpu_custom_call.1} parent=1 // pred_check_branch
      %282 = sbr.rel (0) target = $region41
    $region40: #{tpu_custom_call.1} parent=1 // pred_region
      %283 = dma.done [#allocation4], 256
    $region41: #{tpu_custom_call.1} parent=1 // pred_fallthru
      _
    %284 = vsyncpa [#allocation3], 1
    %285 = vsyncpa [#allocation6], 1
    %286 = vsyncpa [#allocation4], 1

// kernel: tpu_custom_call.1
$region0: #{tpu_custom_call.1}
  #allocation0 [shape = 'u32[]', space=smem, size = 0x4, offset = 0x4, fixed_abs, tag = 'smem constant byte address 0x4 - core index']
  #allocation1 [shape = 'u32[144,128]{1,0:T(1,128)}', space=vmem, size = 0x12000, scoped, tag = 'internal scratch']
  %s0 = inlined_call_operand.hbm [shape: f32[16,32], index: 0, kind: input, shape index: {}]
  %s1 = inlined_call_operand.hbm [shape: bf16[32,128], index: 1, kind: input, shape index: {}]
  %s2 = inlined_call_operand.vmem [shape: f32[1,128], index: 2, kind: input, shape index: {}]
  %s3 = inlined_call_operand.hbm [shape: bf16[128,128], index: 3, kind: input, shape index: {}]
  %s4 = inlined_call_operand.vmem [shape: f32[1,128], index: 4, kind: input, shape index: {}]
  %s5 = inlined_call_operand.hbm [shape: f32[16,128], index: 5, kind: output, shape index: {}]
  %s6 = sld [smem:[#allocation0]]
  $region42: #{tpu_custom_call.1} parent=0
    _
  %s8 = ssub.s32 1, %s6
  %s9 = scalar_select 0, %s8, %s6
  $region1: #{tpu_custom_call.1} parent=0
    #allocation2 [shape = 'u8[8192]{0}', space=vmem, size = 0x2000, scoped, tag = 'input window, operand 0, single buffered']
    #allocation3 [shape = 's32[1]{0}', space=sflag, size = 0x4, scoped, tag = 'scoped memory for tpu_custom_call.1']
    #allocation4 [shape = 's32[1]{0}', space=sflag, size = 0x4, scoped, tag = 'scoped memory for tpu_custom_call.1']
    #allocation5 [shape = 'u8[8192]{0}', space=vmem, size = 0x2000, scoped, tag = 'input window, operand 1, single buffered']
    #allocation6 [shape = 's32[1]{0}', space=sflag, size = 0x4, scoped, tag = 'scoped memory for tpu_custom_call.1']
    #allocation7 [shape = 'u8[32768]{0}', space=vmem, size = 0x8000, scoped, tag = 'input window, operand 3, single buffered']
    #allocation8 [shape = 'u8[8192]{0}', space=vmem, size = 0x2000, scoped, tag = 'output window, operand 0, single buffered']
    %10 = vsyncpa [#allocation3], 0
    %11 = vsyncpa [#allocation6], 0
    %12 = vsyncpa [#allocation4], 0
    // Predicated region
    $region2: #{tpu_custom_call.1} parent=1 // pred_check
      _
    $region3: #{tpu_custom_call.1} parent=1 // pred_check_branch
      %14 = sbr.rel (0) target = $region5
    $region4: #{tpu_custom_call.1} parent=1 // pred_region
      %s16 = ssub.s32 256, 256
      %17 = vsyncadd [#allocation3], %s16
      %s18 = sshll.u32 [#allocation2], 4
      %s19 = int_to_ptr.vmem [resolvable:$true] %s18
      %24 = dma.hbm_to_vmem [thread:$0]  %s0, 256, %s19, [#allocation3], 128, 128, 8
    $region5: #{tpu_custom_call.1} parent=1 // pred_fallthru
      _
    // Predicated region
    $region6: #{tpu_custom_call.1} parent=1 // pred_check
      _
    $region7: #{tpu_custom_call.1} parent=1 // pred_check_branch
      %26 = sbr.rel (0) target = $region9
    $region8: #{tpu_custom_call.1} parent=1 // pred_region
      %s28 = ssub.s32 256, 256
      %29 = vsyncadd [#allocation6], %s28
      %s30 = sshll.u32 [#allocation5], 4
      %s31 = int_to_ptr.vmem [resolvable:$true] %s30
      %36 = dma.hbm_to_vmem [thread:$0]  %s1, 256, %s31, [#allocation6], 64, 64, 4
    $region9: #{tpu_custom_call.1} parent=1 // pred_fallthru
      _
    // Predicated region
    $region10: #{tpu_custom_call.1} parent=1 // pred_check
      _
    $region11: #{tpu_custom_call.1} parent=1 // pred_check_branch
      %38 = sbr.rel (0) target = $region13
    $region12: #{tpu_custom_call.1} parent=1 // pred_region
      _
    $region13: #{tpu_custom_call.1} parent=1 // pred_fallthru
      _
    // Predicated region
    $region14: #{tpu_custom_call.1} parent=1 // pred_check
      _
    $region15: #{tpu_custom_call.1} parent=1 // pred_check_branch
      %40 = sbr.rel (0) target = $region17
    $region16: #{tpu_custom_call.1} parent=1 // pred_region
      %s42 = ssub.s32 1024, 1024
      %43 = vsyncadd [#allocation6], %s42
      %s44 = sshll.u32 [#allocation7], 4
      %s45 = int_to_ptr.vmem [resolvable:$true] %s44
      %50 = dma.hbm_to_vmem [thread:$0]  %s3, 1024, %s45, [#allocation6], 64, 64, 4
    $region17: #{tpu_custom_call.1} parent=1 // pred_fallthru
      _
    // Predicated region
    $region18: #{tpu_custom_call.1} parent=1 // pred_check
      _
    $region19: #{tpu_custom_call.1} parent=1 // pred_check_branch
      %52 = sbr.rel (0) target = $region21
    $region20: #{tpu_custom_call.1} parent=1 // pred_region
      _
    $region21: #{tpu_custom_call.1} parent=1 // pred_fallthru
      _
    // Predicated region
    $region22: #{tpu_custom_call.1} parent=1 // pred_check
      _
    $region23: #{tpu_custom_call.1} parent=1 // pred_check_branch
      %54 = sbr.rel (0) target = $region25
    $region24: #{tpu_custom_call.1} parent=1 // pred_region
      %55 = dma.done [#allocation3], 256
    $region25: #{tpu_custom_call.1} parent=1 // pred_fallthru
      _
    // Predicated region
    $region26: #{tpu_custom_call.1} parent=1 // pred_check
      _
    $region27: #{tpu_custom_call.1} parent=1 // pred_check_branch
      %57 = sbr.rel (0) target = $region29
    $region28: #{tpu_custom_call.1} parent=1 // pred_region
      %58 = dma.done [#allocation6], 256
    $region29: #{tpu_custom_call.1} parent=1 // pred_fallthru
      _
    // Predicated region
    $region30: #{tpu_custom_call.1} parent=1 // pred_check
      _
    $region31: #{tpu_custom_call.1} parent=1 // pred_check_branch
      %60 = sbr.rel (0) target = $region33
    $region32: #{tpu_custom_call.1} parent=1 // pred_region
      %61 = dma.done [#allocation6], 1024
    $region33: #{tpu_custom_call.1} parent=1 // pred_fallthru
      _
    %v63 = vld [vmem:[#allocation2] sm:$0xff]
    %v64 = vld [vmem:[#allocation2 + $0x8] sm:$0xff]
    %v65 = vpack.c.bf16 %v64, %v63
    %v66 = vld [vmem:[#allocation5] sm:$0xf]
    %v67 = vld [vmem:[#allocation5 + $0x4] sm:$0xf]
    %v68 = vld [vmem:[#allocation5 + $0x8] sm:$0xf]
    %v69 = vld [vmem:[#allocation5 + $0xc] sm:$0xf]
    %v70 = vld [vmem:[%s2] sm:$0x1]
    %v72 = vlaneseq
    %v73 = vshrl.u32 %v72, 7
    %v74 = vsub.s32 0, %v73
    %v75 = vrot.slane %v70, %v74
    %v81 = vunpack.c.l.b16 %v66
    %v82 = vunpack.c.l.b16 %v67
    %v83 = vunpack.c.l.b16 %v68
    %v84 = vunpack.c.l.b16 %v69
    %v85 = vpack.c.b16 %v82, %v81
    %v86 = vpack.c.b16 %v84, %v83
    %vm89 = vcmask 261120
    %v91 = vsel %vm89, %v65, 0
    %93 = vmatprep.subr.bf16.mxu0 0
    %94 = vmatpush1.bf16.msra.mxu0 0
    %95 = vmatprep.subr.bf16.mxu0 0
    %96 = vmatpush1.bf16.msra.mxu0 0
    %97 = vmatprep.subr.bf16.mxu0 0
    %98 = vmatpush1.bf16.msra.mxu0 0
    %99 = vmatprep.subr.bf16.mxu0 0
    %100 = vmatpush1.bf16.msra.mxu0 0
    %101 = vmatprep.subr.bf16.mxu0 0
    %102 = vmatpush1.bf16.msra.mxu0 0
    %103 = vmatprep.subr.bf16.mxu0 0
    %104 = vmatpush1.bf16.msra.mxu0 0
    %105 = vmatprep.subr.bf16.mxu0 0
    %106 = vmatpush1.bf16.msra.mxu0 %v86
    %107 = vmatprep.subr.bf16.mxu0 0
    %108 = vmatpush1.bf16.msra.mxu0 %v85
    %109 = vmatprep.subr.bf16.mxu0 0
    %110 = vmatpush2.bf16.msra.mxu0 0
    %111 = vmatprep.subr.bf16.mxu0 0
    %112 = vmatpush2.bf16.msra.mxu0 0
    %113 = vmatprep.subr.bf16.mxu0 0
    %114 = vmatpush2.bf16.msra.mxu0 0
    %115 = vmatprep.subr.bf16.mxu0 0
    %116 = vmatpush2.bf16.msra.mxu0 0
    %117 = vmatprep.subr.bf16.mxu0 0
    %118 = vmatpush2.bf16.msra.mxu0 0
    %119 = vmatprep.subr.bf16.mxu0 0
    %120 = vmatpush2.bf16.msra.mxu0 0
    %121 = vmatprep.subr.bf16.mxu0 0
    %122 = vmatpush2.bf16.msra.mxu0 0
    %123 = vmatprep.subr.bf16.mxu0 0
    %124 = vmatpush2.bf16.msra.mxu0 0
    %125 = vmatprep.mubr.bf16.mxu0 0
    %126 = vmatmul.mubr.bf16.gmra.mxu0 %v91
    %v127 = vpop.f32.mrf.mxu0
    %v128 = vadd.f32 %v75, %v127
    %v129 = vpop.f32.mrf.mxu0
    %v130 = vpop.f32.mrf.mxu0
    %v131 = vadd.f32 %v75, %v130
    %v132 = vpop.f32.mrf.mxu0
    %133 = vdwg.mxu0
    %v134 = vlaneseq
    %v135 = vand.u32 %v134, 127
    %vm136 = vcmp.eq.s32.totalorder %v135, 64
    %v137 = vmax.f32 %v128, 0.0
    %v138 = vmax.f32 %v131, 0.0
    %v139 = vsel %vm136, 1, 0
    %vm140 = vcmp.eq.s32.totalorder %v139, 1
    %v141 = vsel %vm140, %v128, %v137
    %v142 = vsel %vm140, %v131, %v138
    %v143 = vpack.c.bf16 %v142, %v141
    %v144 = vld [vmem:[#allocation7] sm:$0xf]
    %v145 = vld [vmem:[#allocation7 + $0x4] sm:$0xf]
    %v146 = vld [vmem:[#allocation7 + $0x8] sm:$0xf]
    %v147 = vld [vmem:[#allocation7 + $0xc] sm:$0xf]
    %v148 = vld [vmem:[#allocation7 + $0x10] sm:$0xf]
    %v149 = vld [vmem:[#allocation7 + $0x14] sm:$0xf]
    %v150 = vld [vmem:[#allocation7 + $0x18] sm:$0xf]
    %v151 = vld [vmem:[#allocation7 + $0x1c] sm:$0xf]
    %v152 = vld [vmem:[#allocation7 + $0x20] sm:$0xf]
    %v153 = vld [vmem:[#allocation7 + $0x24] sm:$0xf]
    %v154 = vld [vmem:[#allocation7 + $0x28] sm:$0xf]
    %v155 = vld [vmem:[#allocation7 + $0x2c] sm:$0xf]
    %v156 = vld [vmem:[#allocation7 + $0x30] sm:$0xf]
    %v157 = vld [vmem:[#allocation7 + $0x34] sm:$0xf]
    %v158 = vld [vmem:[#allocation7 + $0x38] sm:$0xf]
    %v159 = vld [vmem:[#allocation7 + $0x3c] sm:$0xf]
    %v160 = vld [vmem:[%s4] sm:$0x1]
    %v162 = vlaneseq
    %v163 = vshrl.u32 %v162, 7
    %v164 = vsub.s32 0, %v163
    %v165 = vrot.slane %v160, %v164
    %v183 = vunpack.c.l.b16 %v144
    %v184 = vunpack.c.l.b16 %v145
    %v185 = vunpack.c.l.b16 %v146
    %v186 = vunpack.c.l.b16 %v147
    %v187 = vunpack.c.l.b16 %v148
    %v188 = vunpack.c.l.b16 %v149
    %v189 = vunpack.c.l.b16 %v150
    %v190 = vunpack.c.l.b16 %v151
    %v191 = vunpack.c.l.b16 %v152
    %v192 = vunpack.c.l.b16 %v153
    %v193 = vunpack.c.l.b16 %v154
    %v194 = vunpack.c.l.b16 %v155
    %v195 = vunpack.c.l.b16 %v156
    %v196 = vunpack.c.l.b16 %v157
    %v197 = vunpack.c.l.b16 %v158
    %v198 = vunpack.c.l.b16 %v159
    %v199 = vpack.c.b16 %v184, %v183
    %v200 = vpack.c.b16 %v186, %v185
    %v201 = vpack.c.b16 %v188, %v187
    %v202 = vpack.c.b16 %v190, %v189
    %v203 = vpack.c.b16 %v192, %v191
    %v204 = vpack.c.b16 %v194, %v193
    %v205 = vpack.c.b16 %v196, %v195
    %v206 = vpack.c.b16 %v198, %v197
    %215 = vmatprep.subr.bf16.mxu0 0
    %216 = vmatpush1.bf16.msra.mxu0 %v206
    %217 = vmatprep.subr.bf16.mxu0 0
    %218 = vmatpush1.bf16.msra.mxu0 %v205
    %219 = vmatprep.subr.bf16.mxu0 0
    %220 = vmatpush1.bf16.msra.mxu0 %v204
    %221 = vmatprep.subr.bf16.mxu0 0
    %222 = vmatpush1.bf16.msra.mxu0 %v203
    %223 = vmatprep.subr.bf16.mxu0 0
    %224 = vmatpush1.bf16.msra.mxu0 %v202
    %225 = vmatprep.subr.bf16.mxu0 0
    %226 = vmatpush1.bf16.msra.mxu0 %v201
    %227 = vmatprep.subr.bf16.mxu0 0
    %228 = vmatpush1.bf16.msra.mxu0 %v200
    %229 = vmatprep.subr.bf16.mxu0 0
    %230 = vmatpush1.bf16.msra.mxu0 %v199
    %231 = vmatprep.subr.bf16.mxu0 0
    %232 = vmatpush2.bf16.msra.mxu0 0
    %233 = vmatprep.subr.bf16.mxu0 0
    %234 = vmatpush2.bf16.msra.mxu0 0
    %235 = vmatprep.subr.bf16.mxu0 0
    %236 = vmatpush2.bf16.msra.mxu0 0
    %237 = vmatprep.subr.bf16.mxu0 0
    %238 = vmatpush2.bf16.msra.mxu0 0
    %239 = vmatprep.subr.bf16.mxu0 0
    %240 = vmatpush2.bf16.msra.mxu0 0
    %241 = vmatprep.subr.bf16.mxu0 0
    %242 = vmatpush2.bf16.msra.mxu0 0
    %243 = vmatprep.subr.bf16.mxu0 0
    %244 = vmatpush2.bf16.msra.mxu0 0
    %245 = vmatprep.subr.bf16.mxu0 0
    %246 = vmatpush2.bf16.msra.mxu0 0
    %247 = vmatprep.mubr.bf16.mxu0 0
    %248 = vmatmul.mubr.bf16.gmra.mxu0 %v143
    %v249 = vpop.f32.mrf.mxu0
    %v250 = vadd.f32 %v165, %v249
    %v251 = vpop.f32.mrf.mxu0
    %v252 = vpop.f32.mrf.mxu0
    %v253 = vadd.f32 %v165, %v252
    %v254 = vpop.f32.mrf.mxu0
    %255 = vdwg.mxu0
    %vm256 = vcmp.eq.s32.totalorder %v135, 2
    %v257 = vsel %vm256, 3.1415927, 32.0
    %v258 = vtanh.pop %v250
    %v259 = vtanh.pop %v253
    %vm260 = vcmp.le.s32.totalorder %v135, 2
    %v261 = vmul.f32 %v258, %v257
    %v262 = vmul.f32 %v259, %v257
    %v263 = vsel %vm260, 1, 0
    %vm264 = vcmp.eq.s32.totalorder %v263, 1
    %v265 = vsel %vm264, %v261, %v250
    %v266 = vsel %vm264, %v262, %v253
    %267 = vst [vmem:[#allocation8] sm:$0xff] %v265
    %268 = vst [vmem:[#allocation8 + $0x8] sm:$0xff] %v266
    // Predicated region
    $region34: #{tpu_custom_call.1} parent=1 // pred_check
      _
    $region35: #{tpu_custom_call.1} parent=1 // pred_check_branch
      %270 = sbr.rel (0) target = $region37
    $region36: #{tpu_custom_call.1} parent=1 // pred_region
      %s272 = ssub.s32 256, 256
      %273 = vsyncadd [#allocation4], %s272
      %s274 = sshll.u32 [#allocation8], 4
      %s275 = int_to_ptr.vmem [resolvable:$true] %s274
      %280 = dma.vmem_to_hbm [thread:$0]  %s275, 256, %s5, [#allocation4], 128, 128, 8
    $region37: #{tpu_custom_call.1} parent=1 // pred_fallthru
      _
    // Predicated region
    $region38: #{tpu_custom_call.1} parent=1 // pred_check
      _
    $region39: #{tpu_custom_call.1} parent=1 // pred_check_branch
      %282 = sbr.rel (0) target = $region41
    $region40: #{tpu_custom_call.1} parent=1 // pred_region
      %283 = dma.done [#allocation4], 256
    $region41: #{tpu_custom_call.1} parent=1 // pred_fallthru
      _
    %284 = vsyncpa [#allocation3], 1
    %285 = vsyncpa [#allocation6], 1
    %286 = vsyncpa [#allocation4], 1

</llo_original>
